<compile_context>
chip_gen: v7x
topology: tpu7x:2x2x1
jax: 0.10.0
libtpu: 0.0.40
codegen_flags: <defaults>
</compile_context>

<pallas_src>
import jax
import jax.numpy as jnp
from jax.experimental import pallas as pl
from jax.experimental.pallas import tpu as pltpu

IN_FEATURES = 768
OUT_FEATURES = 1
_LANES = 128


def _round_up(n: int, m: int) -> int:
    return ((n + m - 1) // m) * m


def _linear_kernel(x_ref, w_ref, b_ref, o_ref):
    # x_ref: (TM, 768) VMEM   batch tile of activations (streamed, dbl-buffered)
    # w_ref: (1, 768)  VMEM   weight row (constant index map -> resident)
    # b_ref: (1, 1)    SMEM   scalar bias
    # o_ref: (TM, 1)   VMEM   output tile
    #
    # Two-stage reduction: 6 lane-aligned 128-wide chunks multiply-accumulate
    # on the VPU (f32 via promotion), leaving a single (TM, 128) slab for one
    # cross-lane XLU reduce.  Keeps the kernel DMA-bound on every generation.
    n_chunks = IN_FEATURES // _LANES
    part = x_ref[:, 0:_LANES] * w_ref[:, 0:_LANES]
    for c in range(1, n_chunks):
        lo = c * _LANES
        part = part + x_ref[:, lo:lo + _LANES] * w_ref[:, lo:lo + _LANES]
    acc = jnp.sum(part, axis=-1, keepdims=True)
    o_ref[...] = (acc + b_ref[0, 0]).astype(o_ref.dtype)


def _choose_tile(batch: int, tm: int) -> int:
    """Effective batch tile: multiple of 8, <= padded batch, and small enough
    that the grid has >= 2 steps when possible (so v7x megacore sharding
    engages instead of one TC swallowing the whole batch)."""
    tm = _round_up(max(int(tm), 8), 8)
    padded_b = _round_up(batch, 8)
    if batch > 8:
        half = _round_up(-(-batch // 2), 8)   # ceil(B/2) rounded to sublanes
        tm = min(tm, half)
    return min(tm, padded_b)


def titan_gaussian_process(x, weight, bias, *, tm=4096, min_pallas_batch=512):
    """Forward pass of TitanGaussianProcess (nn.Linear(768, 1)).

    Args:
      x:      (B, 768) activations (f32, or bf16 straight from the producer).
      weight: (1, 768) nn.Linear weight.
      bias:   (1,)     nn.Linear bias.
      tm:     max batch tile (rows of x streamed per grid step). Default 4096
              (~24 MiB double-buffered f32); sweep to 8192 on v6e/v7x if
              desired — vmem_limit_bytes scales automatically.
      min_pallas_batch: below this batch size fall back to plain XLA dot
              (launch overhead dominates a sub-microsecond GEMV).
    Returns:
      (B, 1) in x.dtype.
    """
    B, F = x.shape
    assert F == IN_FEATURES
    assert weight.shape == (OUT_FEATURES, IN_FEATURES)

    if B < min_pallas_batch:
        return x @ weight.T + bias

    w = weight.astype(jnp.float32)
    b = bias.reshape(1, 1).astype(jnp.float32)
    # NOTE: no x.astype(...) here — a wrapper-side cast is an extra HBM pass
    # on x and costs more than it saves (pre-scale-in-wrapper anti-pattern).

    tm_eff = _choose_tile(B, tm)
    grid = (pl.cdiv(B, tm_eff),)

    itemsize = jnp.dtype(x.dtype).itemsize
    x_tile_bytes = tm_eff * IN_FEATURES * itemsize
    # Double-buffered x stream + resident weight/bias/output + headroom.
    vmem_limit = int(min(2 * x_tile_bytes + (8 << 20), 100 << 20))

    cost = pl.CostEstimate(
        flops=2 * B * IN_FEATURES,
        transcendentals=0,
        bytes_accessed=(B * IN_FEATURES * itemsize          # x stream
                        + B * OUT_FEATURES * itemsize        # output
                        + IN_FEATURES * 4 + 4),              # weight + bias
    )

    return pl.pallas_call(
        _linear_kernel,
        out_shape=jax.ShapeDtypeStruct((B, OUT_FEATURES), x.dtype),
        grid_spec=pltpu.PrefetchScalarGridSpec(
            num_scalar_prefetch=0,
            grid=grid,
            in_specs=[
                # x: (tm_eff, 768) tiles, double-buffered by Pallas.
                pl.BlockSpec((tm_eff, IN_FEATURES), lambda i: (i, 0)),
                # weight row: constant index map -> stays resident in VMEM.
                pl.BlockSpec((OUT_FEATURES, IN_FEATURES), lambda i: (0, 0)),
                # bias: scalar in SMEM.
                pl.BlockSpec(memory_space=pltpu.MemorySpace.SMEM),
            ],
            out_specs=pl.BlockSpec((tm_eff, OUT_FEATURES), lambda i: (i, 0)),
        ),
        compiler_params=pltpu.CompilerParams(
            # Batch tiles are independent: shard grid steps across TensorCores.
            dimension_semantics=("parallel",),
            vmem_limit_bytes=vmem_limit,
        ),
        cost_estimate=cost,
    )(x, w, b)


if __name__ == "__main__":
    key = jax.random.PRNGKey(0)
    k_x, k_w, k_b = jax.random.split(key, 3)

    B = 40  # small batch; not a multiple of the test tile -> ragged last block
    x = jax.random.normal(k_x, (B, IN_FEATURES), dtype=jnp.float32)

    # Deterministic init mimicking nn.Linear's uniform(-1/sqrt(768), 1/sqrt(768)).
    bound = 1.0 / (IN_FEATURES ** 0.5)
    weight = jax.random.uniform(
        k_w, (OUT_FEATURES, IN_FEATURES), minval=-bound, maxval=bound,
        dtype=jnp.float32)
    bias = jax.random.uniform(
        k_b, (OUT_FEATURES,), minval=-bound, maxval=bound, dtype=jnp.float32)

    ref = x @ weight.T + bias

    # 1) Multi-step pipelined grid (tm=16 -> 3 grid steps, last block ragged).
    out_tiled = jax.block_until_ready(
        titan_gaussian_process(x, weight, bias, tm=16, min_pallas_batch=0))
    assert out_tiled.shape == (B, OUT_FEATURES)
    assert jnp.allclose(out_tiled, ref, atol=1e-5, rtol=1e-5), "tiled mismatch"

    # 2) Default tile: megacore clamp forces >=2 grid steps (tile=24, grid=2).
    out_default = jax.block_until_ready(
        titan_gaussian_process(x, weight, bias, min_pallas_batch=0))
    assert jnp.allclose(out_default, ref, atol=1e-5, rtol=1e-5), "default mismatch"

    # 3) Production small-batch fallback path (B < min_pallas_batch).
    out_fallback = jax.block_until_ready(
        titan_gaussian_process(x, weight, bias))
    assert jnp.allclose(out_fallback, ref, atol=1e-5, rtol=1e-5), "fallback mismatch"

    print("KERNEL_OK")
</pallas_src>

<mosaic_0001>
module attributes {stable_mosaic.version = 11 : i64} {
  func.func @_linear_kernel(%arg0: i32, %arg1: memref<16x768xf32, #tpu.memory_space<vmem>>, %arg2: memref<1x768xf32, #tpu.memory_space<vmem>>, %arg3: memref<1x1xf32, #tpu.memory_space<smem>>, %arg4: memref<16x1xf32, #tpu.memory_space<vmem>>) attributes {dimension_semantics = [#tpu.dimension_semantics<parallel>], iteration_bounds = array<i64: 3>, scalar_prefetch = 0 : i64, scratch_operands = 0 : i64, tpu.core_type = #tpu.core_type<tc>, window_params = [{transform_indices = @transform_0, window_bounds = array<i64: 16, 768>}, {pipeline_mode = #tpu.pipeline_mode<synchronous>, transform_indices = @transform_1, window_bounds = array<i64: 1, 768>}, {transform_indices = @transform_2, window_bounds = array<i64: 1, 1>}, {transform_indices = @transform_3, window_bounds = array<i64: 16, 1>}]} {
    %c0 = arith.constant 0 : index
    %c0_0 = arith.constant 0 : index
    %0 = vector.load %arg1[%c0, %c0_0] : memref<16x768xf32, #tpu.memory_space<vmem>>, vector<16x128xf32>
    %c0_1 = arith.constant 0 : index
    %c0_2 = arith.constant 0 : index
    %1 = vector.load %arg2[%c0_1, %c0_2] : memref<1x768xf32, #tpu.memory_space<vmem>>, vector<1x128xf32>
    %2 = vector.broadcast %1 : vector<1x128xf32> to vector<16x128xf32>
    %3 = arith.mulf %0, %2 : vector<16x128xf32>
    %c0_3 = arith.constant 0 : index
    %c128 = arith.constant 128 : index
    %4 = vector.load %arg1[%c0_3, %c128] : memref<16x768xf32, #tpu.memory_space<vmem>>, vector<16x128xf32>
    %c0_4 = arith.constant 0 : index
    %c128_5 = arith.constant 128 : index
    %5 = vector.load %arg2[%c0_4, %c128_5] : memref<1x768xf32, #tpu.memory_space<vmem>>, vector<1x128xf32>
    %6 = vector.broadcast %5 : vector<1x128xf32> to vector<16x128xf32>
    %7 = arith.mulf %4, %6 : vector<16x128xf32>
    %8 = arith.addf %3, %7 : vector<16x128xf32>
    %c0_6 = arith.constant 0 : index
    %c256 = arith.constant 256 : index
    %9 = vector.load %arg1[%c0_6, %c256] : memref<16x768xf32, #tpu.memory_space<vmem>>, vector<16x128xf32>
    %c0_7 = arith.constant 0 : index
    %c256_8 = arith.constant 256 : index
    %10 = vector.load %arg2[%c0_7, %c256_8] : memref<1x768xf32, #tpu.memory_space<vmem>>, vector<1x128xf32>
    %11 = vector.broadcast %10 : vector<1x128xf32> to vector<16x128xf32>
    %12 = arith.mulf %9, %11 : vector<16x128xf32>
    %13 = arith.addf %8, %12 : vector<16x128xf32>
    %c0_9 = arith.constant 0 : index
    %c384 = arith.constant 384 : index
    %14 = vector.load %arg1[%c0_9, %c384] : memref<16x768xf32, #tpu.memory_space<vmem>>, vector<16x128xf32>
    %c0_10 = arith.constant 0 : index
    %c384_11 = arith.constant 384 : index
    %15 = vector.load %arg2[%c0_10, %c384_11] : memref<1x768xf32, #tpu.memory_space<vmem>>, vector<1x128xf32>
    %16 = vector.broadcast %15 : vector<1x128xf32> to vector<16x128xf32>
    %17 = arith.mulf %14, %16 : vector<16x128xf32>
    %18 = arith.addf %13, %17 : vector<16x128xf32>
    %c0_12 = arith.constant 0 : index
    %c512 = arith.constant 512 : index
    %19 = vector.load %arg1[%c0_12, %c512] : memref<16x768xf32, #tpu.memory_space<vmem>>, vector<16x128xf32>
    %c0_13 = arith.constant 0 : index
    %c512_14 = arith.constant 512 : index
    %20 = vector.load %arg2[%c0_13, %c512_14] : memref<1x768xf32, #tpu.memory_space<vmem>>, vector<1x128xf32>
    %21 = vector.broadcast %20 : vector<1x128xf32> to vector<16x128xf32>
    %22 = arith.mulf %19, %21 : vector<16x128xf32>
    %23 = arith.addf %18, %22 : vector<16x128xf32>
    %c0_15 = arith.constant 0 : index
    %c640 = arith.constant 640 : index
    %24 = vector.load %arg1[%c0_15, %c640] : memref<16x768xf32, #tpu.memory_space<vmem>>, vector<16x128xf32>
    %c0_16 = arith.constant 0 : index
    %c640_17 = arith.constant 640 : index
    %25 = vector.load %arg2[%c0_16, %c640_17] : memref<1x768xf32, #tpu.memory_space<vmem>>, vector<1x128xf32>
    %26 = vector.broadcast %25 : vector<1x128xf32> to vector<16x128xf32>
    %27 = arith.mulf %24, %26 : vector<16x128xf32>
    %28 = arith.addf %23, %27 : vector<16x128xf32>
    %cst = arith.constant dense<0.000000e+00> : vector<16xf32>
    %29 = vector.multi_reduction <add>, %28, %cst [1] : vector<16x128xf32> to vector<16xf32>
    %30 = vector.shape_cast %29 : vector<16xf32> to vector<16x1xf32>
    %c0_18 = arith.constant 0 : index
    %c0_19 = arith.constant 0 : index
    %31 = memref.load %arg3[%c0_18, %c0_19] : memref<1x1xf32, #tpu.memory_space<smem>>
    %32 = vector.broadcast %31 : f32 to vector<16x1xf32>
    %33 = arith.addf %30, %32 : vector<16x1xf32>
    %c0_20 = arith.constant 0 : index
    %c0_21 = arith.constant 0 : index
    %34 = vector.load %arg4[%c0_20, %c0_21] : memref<16x1xf32, #tpu.memory_space<vmem>>, vector<16x1xf32>
    tpu.vector_store %arg4[%c0_20, %c0_21], %33 {strides = array<i32>} : memref<16x1xf32, #tpu.memory_space<vmem>>, vector<16x1xf32>,
    return
  }
  func.func @transform_0(%arg0: i32) -> (i32, i32) {
    %c0_i32 = arith.constant 0 : i32
    %c0_i32_0 = arith.constant 0 : i32
    return %arg0, %c0_i32 : i32, i32
  }
  func.func @transform_1(%arg0: i32) -> (i32, i32) {
    %c0_i32 = arith.constant 0 : i32
    %c0_i32_0 = arith.constant 0 : i32
    %c0_i32_1 = arith.constant 0 : i32
    return %c0_i32, %c0_i32_0 : i32, i32
  }
  func.func @transform_2(%arg0: i32) -> (i32, i32) {
    %c0_i32 = arith.constant 0 : i32
    %c0_i32_0 = arith.constant 0 : i32
    %c0_i32_1 = arith.constant 0 : i32
    return %c0_i32, %c0_i32_0 : i32, i32
  }
  func.func @transform_3(%arg0: i32) -> (i32, i32) {
    %c0_i32 = arith.constant 0 : i32
    %c0_i32_0 = arith.constant 0 : i32
    return %arg0, %c0_i32 : i32, i32
  }
}

</mosaic_0001>

<llo_original>
// kernel: tpu_custom_call.1
$region0: #{tpu_custom_call.1}
  #allocation0 [shape = 'u32[]', space=smem, size = 0x4, offset = 0x4, fixed_abs, tag = 'smem constant byte address 0x4 - core index']
  #allocation1 [shape = 'u32[144,128]{1,0:T(1,128)}', space=vmem, size = 0x12000, scoped, tag = 'internal scratch']
  #allocation2 [shape = 'f32[1,1]{1,0:T(1,128)S(6)}', space=smem, size = 0x200, scoped, tag = 'scoped memory for tpu_custom_call.1']
  %s0 = inlined_call_operand.hbm [shape: f32[40,768], index: 0, kind: input, shape index: {}]
  %s1 = inlined_call_operand.vmem [shape: f32[1,768], index: 1, kind: input, shape index: {}]
  %s2 = inlined_call_operand.<no memory space> [shape: f32[1,1], index: 2, kind: input, shape index: {}]
  %s3 = inlined_call_operand.vmem [shape: f32[40,1], index: 3, kind: output, shape index: {}]
  %s4 = sld [smem:[#allocation0]]
  $region97: #{tpu_custom_call.1} parent=0
    _
  %s6 = ssub.s32 1, %s4
  %s7 = scalar_select 0, %s6, %s4
  %8 = sst [smem:[#allocation2]] %s2
  $region1: #{tpu_custom_call.1} parent=0
    #allocation3 [shape = 'u8[98304]{0}', space=vmem, size = 0x18000, scoped, tag = 'input window, operand 0']
    #allocation4 [shape = 's32[2]{0}', space=sflag, size = 0x8, scoped, tag = 'scoped memory for tpu_custom_call.1']
    #allocation5 [shape = 'u8[16384]{0}', space=vmem, size = 0x4000, scoped, tag = 'output window, operand 0']
    %9 = vsyncpa [#allocation4], 0
    %s10 = scalar_lea.sflag [#allocation4], 1
    %11 = vsyncpa %s10, 0
    loop: start=0, step=1, limit=5
    $region2: #{tpu_custom_call.1} parent=1 // loop_pre_header
      _
    $region3: #{tpu_custom_call.1} parent=1 // loop_header
      %s13 = sphi 0, %s17
      %p14 = scmp.ge.s32.totalorder %s13, 5
      %s23 = sphi 0, %s25
      %s26 = sphi 0, %s23
      %s27 = sphi 0, %s26
      %s43 = sphi 0, %s27
      %s47 = sphi 0, %s47
      %s49 = sphi 0, %s47
      %s50 = sphi 0, %s49
      %s64 = sphi 0, %s50
      %s68 = sphi 0, %s68
      %s70 = sphi 0, %s68
      %s71 = sphi 0, %s70
      %s85 = sphi 0, %s71
      %s91 = sphi 0, %s93
      %s94 = sphi 0, %s91
      %s95 = sphi 0, %s94
      %s111 = sphi 0, %s95
    $region4: #{tpu_custom_call.1} parent=1 // loop_header_branch
      %16 = sbr.rel (%p14) target = $region8
    $region5: #{tpu_custom_call.1} parent=1 // loop_body
      %s18 = ssub.s32 %s13, 1
      %s19 = ssub.s32 %s13, 2
      %s20 = sadd.s32 %s13, 1
      %s21 = ssub.s32 %s13, %s20
      %p22 = scmp.eq.s32.totalorder %s21, 0
      %s24 = sadd.s32 %s23, 1
      %s25 = scalar_select %p22, %s23, %s24
      %p28 = pneg %p22
      %p29 = scmp.eq.s32.totalorder %s13, 2
      %p30 = por %p28, %p29
      %p31 = scmp.ne.s32.totalorder %s23, %s26
      %p32 = scmp.eq.s32.totalorder %s13, 0
      %p33 = por %p31, %p32
      %p34 = scmp.ne.s32.totalorder %s23, %s26
      %p35 = scmp.eq.s32.totalorder %s18, 2
      %p36 = por %p34, %p35
      %p37 = scmp.ne.s32.totalorder %s26, %s27
      %p38 = scmp.eq.s32.totalorder %s18, 0
      %p39 = por %p37, %p38
      %p40 = scmp.ne.s32.totalorder %s26, %s27
      %p41 = scmp.eq.s32.totalorder %s19, 2
      %p42 = por %p40, %p41
      %p44 = scmp.ne.s32.totalorder %s27, %s43
      %p45 = scmp.eq.s32.totalorder %s19, 0
      %p46 = por %p44, %p45
      %s48 = sadd.s32 %s47, 1
      %p51 = scmp.eq.s32.totalorder %s13, 2
      %p52 = scmp.ne.s32.totalorder %s47, %s49
      %p53 = scmp.eq.s32.totalorder %s13, 0
      %p54 = por %p52, %p53
      %p55 = scmp.ne.s32.totalorder %s47, %s49
      %p56 = scmp.eq.s32.totalorder %s18, 2
      %p57 = por %p55, %p56
      %p58 = scmp.ne.s32.totalorder %s49, %s50
      %p59 = scmp.eq.s32.totalorder %s18, 0
      %p60 = por %p58, %p59
      %p61 = scmp.ne.s32.totalorder %s49, %s50
      %p62 = scmp.eq.s32.totalorder %s19, 2
      %p63 = por %p61, %p62
      %p65 = scmp.ne.s32.totalorder %s50, %s64
      %p66 = scmp.eq.s32.totalorder %s19, 0
      %p67 = por %p65, %p66
      %s69 = sadd.s32 %s68, 1
      %p72 = scmp.eq.s32.totalorder %s13, 2
      %p73 = scmp.ne.s32.totalorder %s68, %s70
      %p74 = scmp.eq.s32.totalorder %s13, 0
      %p75 = por %p73, %p74
      %p76 = scmp.ne.s32.totalorder %s68, %s70
      %p77 = scmp.eq.s32.totalorder %s18, 2
      %p78 = por %p76, %p77
      %p79 = scmp.ne.s32.totalorder %s70, %s71
      %p80 = scmp.eq.s32.totalorder %s18, 0
      %p81 = por %p79, %p80
      %p82 = scmp.ne.s32.totalorder %s70, %s71
      %p83 = scmp.eq.s32.totalorder %s19, 2
      %p84 = por %p82, %p83
      %p86 = scmp.ne.s32.totalorder %s71, %s85
      %p87 = scmp.eq.s32.totalorder %s19, 0
      %p88 = por %p86, %p87
      %s89 = ssub.s32 %s13, %s20
      %p90 = scmp.eq.s32.totalorder %s89, 0
      %s92 = sadd.s32 %s91, 1
      %s93 = scalar_select %p90, %s91, %s92
      %p96 = pneg %p90
      %p97 = scmp.eq.s32.totalorder %s13, 2
      %p98 = por %p96, %p97
      %p99 = scmp.ne.s32.totalorder %s91, %s94
      %p100 = scmp.eq.s32.totalorder %s13, 0
      %p101 = por %p99, %p100
      %p102 = scmp.ne.s32.totalorder %s91, %s94
      %p103 = scmp.eq.s32.totalorder %s18, 2
      %p104 = por %p102, %p103
      %p105 = scmp.ne.s32.totalorder %s94, %s95
      %p106 = scmp.eq.s32.totalorder %s18, 0
      %p107 = por %p105, %p106
      %p108 = scmp.ne.s32.totalorder %s94, %s95
      %p109 = scmp.eq.s32.totalorder %s19, 2
      %p110 = por %p108, %p109
      %p112 = scmp.ne.s32.totalorder %s95, %s111
      %p113 = scmp.eq.s32.totalorder %s19, 0
      %p114 = por %p112, %p113
      %p115 = scmp.le.s32.totalorder 1, %s13
      %p116 = scmp.lt.s32.totalorder %s13, 4
      %p117 = pnand %p115, %p116
      %p118 = pneg %p117
      // Predicated region
      $region9: #{tpu_custom_call.1} parent=5 // pred_check
        _
      $region10: #{tpu_custom_call.1} parent=5 // pred_check_branch
        %120 = sbr.rel (%p117) target = $region12
      $region11: #{tpu_custom_call.1} parent=5 // pred_region
        %s121 = ssub.s32 %s13, 1
        // Predicated region
        $region13: #{tpu_custom_call.1} parent=11 // pred_check
          %p122 = pneg %p60
        $region14: #{tpu_custom_call.1} parent=11 // pred_check_branch
          %124 = sbr.rel (%p122) target = $region16
        $region15: #{tpu_custom_call.1} parent=11 // pred_region
          _
        $region16: #{tpu_custom_call.1} parent=11 // pred_fallthru
          _
        // Predicated region
        $region17: #{tpu_custom_call.1} parent=11 // pred_check
          %p125 = pneg %p81
        $region18: #{tpu_custom_call.1} parent=11 // pred_check_branch
          %127 = sbr.rel (%p125) target = $region20
        $region19: #{tpu_custom_call.1} parent=11 // pred_region
          _
        $region20: #{tpu_custom_call.1} parent=11 // pred_fallthru
          _
      $region12: #{tpu_custom_call.1} parent=5 // pred_fallthru
        _
      %p128 = scmp.lt.s32.totalorder %s13, 3
      // Predicated region
      $region21: #{tpu_custom_call.1} parent=5 // pred_check
        %p129 = pneg %p128
      $region22: #{tpu_custom_call.1} parent=5 // pred_check_branch
        %131 = sbr.rel (%p129) target = $region24
      $region23: #{tpu_custom_call.1} parent=5 // pred_region
        // Predicated region
        $region25: #{tpu_custom_call.1} parent=23 // pred_check
          %p132 = pneg %p33
        $region26: #{tpu_custom_call.1} parent=23 // pred_check_branch
          %134 = sbr.rel (%p132) target = $region28
        $region27: #{tpu_custom_call.1} parent=23 // pred_region
          %s135 = sand.u32 %s23, 1
          %s136 = scalar_lea.sflag [#allocation4], %s135
          %s137 = sand.u32 %s23, 1
          %s138 = smul.addr %s137, 96
          %s139 = scalar_lea.vmem [#allocation3], %s138
          %s140 = smul.u32 2, %s13
          %s141 = ssub.s32 5, %s140
          %p142 = scmp.lt.s32.totalorder %s141, 2
          %s143 = scalar_select %p142, %s141, 2
          %s144 = smul.u32 128, %s143
          %s145 = smul.u32 %s144, 6
          %s147 = ssub.s32 1536, %s145
          %148 = vsyncadd %s136, %s147
          %p149 = scmp.ne.s32.totalorder 0, %s145
          %s150 = smul.addr %s140, 6
          %s151 = smul.addr %s150, 128
          %s152 = scalar_lea.hbm %s0, %s151
          %s153 = smul.u32 48, %s143
          %s154 = sshll.u32 %s139, 4
          %s155 = int_to_ptr.vmem [resolvable:$true] %s154
          %s156 = sshll.u32 %s153, 4
          %160 = dma.hbm_to_vmem [thread:$0]  (%p149), %s152, %s156, %s155, %s136, 768, 768, 48
        $region28: #{tpu_custom_call.1} parent=23 // pred_fallthru
          _
      $region24: #{tpu_custom_call.1} parent=5 // pred_fallthru
        _
      %p161 = scmp.le.s32.totalorder 1, %s13
      %p162 = scmp.lt.s32.totalorder %s13, 4
      %p163 = pnand %p161, %p162
      %p164 = pneg %p163
      // Predicated region
      $region29: #{tpu_custom_call.1} parent=5 // pred_check
        _
      $region30: #{tpu_custom_call.1} parent=5 // pred_check_branch
        %166 = sbr.rel (%p163) target = $region32
      $region31: #{tpu_custom_call.1} parent=5 // pred_region
        %s167 = ssub.s32 %s13, 1
        %s168 = sand.u32 %s26, 1
        %s169 = scalar_lea.sflag [#allocation4], %s168
        %s170 = sand.u32 %s26, 1
        %s171 = smul.addr %s170, 96
        %s172 = scalar_lea.vmem [#allocation3], %s171
        // Predicated region
        $region33: #{tpu_custom_call.1} parent=31 // pred_check
          %p173 = pneg %p39
        $region34: #{tpu_custom_call.1} parent=31 // pred_check_branch
          %175 = sbr.rel (%p173) target = $region36
        $region35: #{tpu_custom_call.1} parent=31 // pred_region
          %176 = dma.done %s169, 1536
        $region36: #{tpu_custom_call.1} parent=31 // pred_fallthru
          _
        %s177 = sand.u32 %s26, 1
        %s178 = scalar_lea.sflag [#allocation4], %s177
        %s179 = sand.u32 %s26, 1
        %s180 = smul.addr %s179, 96
        %s181 = scalar_lea.vmem [#allocation3], %s180
        %p182 = pneg %p39
        %p183 = pneg %p36
        %p184 = pneg %p60
        %p185 = pneg %p57
        %p186 = pneg %p81
        %p187 = pneg %p78
        %p188 = pneg %p107
        %p189 = pneg %p104
        %s190 = sand.u32 %s94, 1
        %s191 = sand.u32 %s94, 1
        %s192 = smul.addr %s191, 16
        %s193 = scalar_lea.vmem [#allocation5], %s192
        %s194 = smul.u32 2, %s18
        %s195 = ssub.s32 5, %s194
        %p196 = scmp.lt.s32.totalorder %s195, 2
        %s197 = scalar_select %p196, %s195, 2
        %s198 = smul.u32 128, %s197
        %s199 = smul.u32 %s198, 6
        %s200 = smul.u32 2, %s18
        %s201 = ssub.s32 5, %s200
        %p202 = scmp.lt.s32.totalorder %s201, 2
        %s203 = scalar_select %p202, %s201, 2
        %s204 = smul.u32 128, %s203
        %v205 = vld [vmem:[%s172] sm:$0xff]
        %v206 = vld [vmem:[%s172 + $0x30] sm:$0xff]
        %v207 = vld [vmem:[%s1] sm:$0x1]
        %v209 = vlaneseq
        %v210 = vshrl.u32 %v209, 7
        %v211 = vsub.s32 0, %v210
        %v212 = vrot.slane %v207, %v211
        %v214 = vmul.f32 %v205, %v212
        %v215 = vmul.f32 %v206, %v212
        %v216 = vld [vmem:[%s172 + $0x8] sm:$0xff]
        %v217 = vld [vmem:[%s172 + $0x38] sm:$0xff]
        %v218 = vld [vmem:[%s1 + $0x1] sm:$0x1]
        %v220 = vlaneseq
        %v221 = vshrl.u32 %v220, 7
        %v222 = vsub.s32 0, %v221
        %v223 = vrot.slane %v218, %v222
        %v225 = vmul.f32 %v216, %v223
        %v226 = vmul.f32 %v217, %v223
        %v227 = vadd.f32 %v214, %v225
        %v228 = vadd.f32 %v215, %v226
        %v229 = vld [vmem:[%s172 + $0x10] sm:$0xff]
        %v230 = vld [vmem:[%s172 + $0x40] sm:$0xff]
        %v231 = vld [vmem:[%s1 + $0x2] sm:$0x1]
        %v233 = vlaneseq
        %v234 = vshrl.u32 %v233, 7
        %v235 = vsub.s32 0, %v234
        %v236 = vrot.slane %v231, %v235
        %v238 = vmul.f32 %v229, %v236
        %v239 = vmul.f32 %v230, %v236
        %v240 = vadd.f32 %v227, %v238
        %v241 = vadd.f32 %v228, %v239
        %v242 = vld [vmem:[%s172 + $0x18] sm:$0xff]
        %v243 = vld [vmem:[%s172 + $0x48] sm:$0xff]
        %v244 = vld [vmem:[%s1 + $0x3] sm:$0x1]
        %v246 = vlaneseq
        %v247 = vshrl.u32 %v246, 7
        %v248 = vsub.s32 0, %v247
        %v249 = vrot.slane %v244, %v248
        %v251 = vmul.f32 %v242, %v249
        %v252 = vmul.f32 %v243, %v249
        %v253 = vadd.f32 %v240, %v251
        %v254 = vadd.f32 %v241, %v252
        %v255 = vld [vmem:[%s172 + $0x20] sm:$0xff]
        %v256 = vld [vmem:[%s172 + $0x50] sm:$0xff]
        %v257 = vld [vmem:[%s1 + $0x4] sm:$0x1]
        %v259 = vlaneseq
        %v260 = vshrl.u32 %v259, 7
        %v261 = vsub.s32 0, %v260
        %v262 = vrot.slane %v257, %v261
        %v264 = vmul.f32 %v255, %v262
        %v265 = vmul.f32 %v256, %v262
        %v266 = vadd.f32 %v253, %v264
        %v267 = vadd.f32 %v254, %v265
        %v268 = vld [vmem:[%s172 + $0x28] sm:$0xff]
        %v269 = vld [vmem:[%s172 + $0x58] sm:$0xff]
        %v270 = vld [vmem:[%s1 + $0x5] sm:$0x1]
        %v272 = vlaneseq
        %v273 = vshrl.u32 %v272, 7
        %v274 = vsub.s32 0, %v273
        %v275 = vrot.slane %v270, %v274
        %v277 = vmul.f32 %v268, %v275
        %v278 = vmul.f32 %v269, %v275
        %v279 = vadd.f32 %v266, %v277
        %v280 = vadd.f32 %v267, %v278
        %281 = vadd.xlane.f32.xlu0 %v279
        %v282 = vpop.xlane.xlu0 %281
        %283 = vadd.xlane.f32.xlu0 %v280
        %v284 = vpop.xlane.xlu0 %283
        %s285 = sld [smem:[#allocation2]]
        %v286 = vstv %s285
        %v287 = vadd.f32 %v282, %v286
        %v288 = vadd.f32 %v284, %v286
        %vm289 = vcmask 7168
        %290 = vst.msk [vmem:[%s193] sm:$0xff] %vm289, %v287
        %291 = vst.msk [vmem:[%s193 + $0x8] sm:$0xff] %vm289, %v288
        %s292 = sand.u32 %s94, 1
        %s293 = sand.u32 %s94, 1
        %s294 = smul.addr %s293, 16
        %s295 = scalar_lea.vmem [#allocation5], %s294
        // Predicated region
        $region37: #{tpu_custom_call.1} parent=31 // pred_check
          %p296 = pneg %p104
        $region38: #{tpu_custom_call.1} parent=31 // pred_check_branch
          %298 = sbr.rel (%p296) target = $region40
        $region39: #{tpu_custom_call.1} parent=31 // pred_region
          %s299 = smul.u32 2, %s18
          %s300 = ssub.s32 5, %s299
          %p301 = scmp.lt.s32.totalorder %s300, 2
          %s302 = scalar_select %p301, %s300, 2
          %s303 = smul.u32 128, %s302
          %p304 = scmp.ne.s32.totalorder 0, %s303
          %s305 = smul.addr %s299, 8
          %s306 = scalar_lea.vmem %s3, %s305
          // Predicated region
          $region41: #{tpu_custom_call.1} parent=39 // pred_check
            %p307 = pneg %p304
          $region42: #{tpu_custom_call.1} parent=39 // pred_check_branch
            %309 = sbr.rel (%p307) target = $region44
          $region43: #{tpu_custom_call.1} parent=39 // pred_region
            // Predicated region
            $region45: #{tpu_custom_call.1} parent=43 // pred_check
              _
            $region46: #{tpu_custom_call.1} parent=43 // pred_check_branch
              %311 = sbr.rel (0) target = $region48
            $region47: #{tpu_custom_call.1} parent=43 // pred_region
              // Predicated region
              $region67: #{tpu_custom_call.1} parent=47 // pred_check
                _
              $region68: #{tpu_custom_call.1} parent=47 // pred_check_branch
                %362 = sbr.rel (0) target = $region70
              $region69: #{tpu_custom_call.1} parent=47 // pred_region
                %s363 = sshrl.u32 %s302, 1
                // While loop
                $region71: #{tpu_custom_call.1} parent=69 // loop_pre_header
                  _
                $region72: #{tpu_custom_call.1} parent=69 // loop_header
                  %s365 = sphi 0, %s367
                  %p366 = scmp.ge.s32.totalorder %s365, %s363
                  %s370 = sphi 0, %s379
                  %s371 = sphi %s295, %s382
                  %s372 = sphi %s306, %s383
                $region73: #{tpu_custom_call.1} parent=69 // loop_header_branch
                  %369 = sbr.rel (%p366) target = $region77
                $region74: #{tpu_custom_call.1} parent=69 // loop_body
                  %v373 = vld [vmem:[%s371] sm:$0xff]
                  %374 = vst [vmem:[%s372] sm:$0xff] %v373
                  %v375 = vld [vmem:[%s371 + $0x8] sm:$0xff]
                  %376 = vst [vmem:[%s372 + $0x8] sm:$0xff] %v375
                  %s377 = sadd.s32 1, %s370
                  %p378 = scmp.ge.s32.totalorder %s377, %s363
                  %s379 = scalar_select %p378, 0, %s377
                  %s380 = smul.u32 %s379, 16
                  %s381 = smul.u32 %s379, 16
                  %s382 = scalar_lea.vmem %s295, %s380 [#allocation5]
                  %s383 = scalar_lea.vmem %s306, %s381
                $region75: #{tpu_custom_call.1} parent=69 // loop_footer
                  %s367 = sadd.s32 %s365, 1
                $region76: #{tpu_custom_call.1} parent=69 // loop_footer_branch
                  %364 = sbr.rel target = $region72
                $region77: #{tpu_custom_call.1} parent=69 // loop_exit
                  _
                %s384 = sshrl.u32 %s302, 1
                %s385 = sand.u32 %s302, 1
                %s386 = smul.u32 %s384, 2
                %s387 = smul.u32 8, %s386
                %s388 = scalar_lea.vmem %s295, %s387 [#allocation5]
                %s389 = smul.u32 8, %s386
                %s390 = scalar_lea.vmem %s306, %s389
                // While loop
                $region78: #{tpu_custom_call.1} parent=69 // loop_pre_header
                  _
                $region79: #{tpu_custom_call.1} parent=69 // loop_header
                  %s392 = sphi 0, %s394
                  %p393 = scmp.ge.s32.totalorder %s392, %s385
                  %s397 = sphi 0, %s404
                  %s398 = sphi %s388, %s407
                  %s399 = sphi %s390, %s408
                $region80: #{tpu_custom_call.1} parent=69 // loop_header_branch
                  %396 = sbr.rel (%p393) target = $region84
                $region81: #{tpu_custom_call.1} parent=69 // loop_body
                  %v400 = vld [vmem:[%s398] sm:$0xff]
                  %401 = vst [vmem:[%s399] sm:$0xff] %v400
                  %s402 = sadd.s32 1, %s397
                  %p403 = scmp.ge.s32.totalorder %s402, %s385
                  %s404 = scalar_select %p403, 0, %s402
                  %s405 = smul.u32 %s404, 8
                  %s406 = smul.u32 %s404, 8
                  %s407 = scalar_lea.vmem %s388, %s405 [#allocation5]
                  %s408 = scalar_lea.vmem %s390, %s406
                $region82: #{tpu_custom_call.1} parent=69 // loop_footer
                  %s394 = sadd.s32 %s392, 1
                $region83: #{tpu_custom_call.1} parent=69 // loop_footer_branch
                  %391 = sbr.rel target = $region79
                $region84: #{tpu_custom_call.1} parent=69 // loop_exit
                  _
              $region70: #{tpu_custom_call.1} parent=47 // pred_fallthru
                _
              // Predicated region
              $region85: #{tpu_custom_call.1} parent=47 // pred_check
                _
              $region86: #{tpu_custom_call.1} parent=47 // pred_check_branch
                %410 = sbr.rel target = $region88
              $region87: #{tpu_custom_call.1} parent=47 // pred_region
                _
              $region88: #{tpu_custom_call.1} parent=47 // pred_fallthru
                _
            $region48: #{tpu_custom_call.1} parent=43 // pred_fallthru
              _
            // Predicated region
            $region49: #{tpu_custom_call.1} parent=43 // pred_check
              _
            $region50: #{tpu_custom_call.1} parent=43 // pred_check_branch
              %313 = sbr.rel target = $region52
            $region51: #{tpu_custom_call.1} parent=43 // pred_region
              %s315 = sshrl.u32 %s302, 1
              // While loop
              $region53: #{tpu_custom_call.1} parent=51 // loop_pre_header
                _
              $region54: #{tpu_custom_call.1} parent=51 // loop_header
                %s317 = sphi 0, %s319
                %p318 = scmp.ge.s32.totalorder %s317, %s315
                %s322 = sphi 0, %s331
                %s323 = sphi %s295, %s334
                %s324 = sphi %s306, %s335
              $region55: #{tpu_custom_call.1} parent=51 // loop_header_branch
                %321 = sbr.rel (%p318) target = $region59
              $region56: #{tpu_custom_call.1} parent=51 // loop_body
                %v325 = vld [vmem:[%s323] sm:$0xff]
                %326 = vst [vmem:[%s324] sm:$0xff] %v325
                %v327 = vld [vmem:[%s323 + $0x8] sm:$0xff]
                %328 = vst [vmem:[%s324 + $0x8] sm:$0xff] %v327
                %s329 = sadd.s32 1, %s322
                %p330 = scmp.ge.s32.totalorder %s329, %s315
                %s331 = scalar_select %p330, 0, %s329
                %s332 = smul.u32 %s331, 16
                %s333 = smul.u32 %s331, 16
                %s334 = scalar_lea.vmem %s295, %s332 [#allocation5]
                %s335 = scalar_lea.vmem %s306, %s333
              $region57: #{tpu_custom_call.1} parent=51 // loop_footer
                %s319 = sadd.s32 %s317, 1
              $region58: #{tpu_custom_call.1} parent=51 // loop_footer_branch
                %316 = sbr.rel target = $region54
              $region59: #{tpu_custom_call.1} parent=51 // loop_exit
                _
              %s336 = sshrl.u32 %s302, 1
              %s337 = sand.u32 %s302, 1
              %s338 = smul.u32 %s336, 2
              %s339 = smul.u32 8, %s338
              %s340 = scalar_lea.vmem %s295, %s339 [#allocation5]
              %s341 = smul.u32 8, %s338
              %s342 = scalar_lea.vmem %s306, %s341
              // While loop
              $region60: #{tpu_custom_call.1} parent=51 // loop_pre_header
                _
              $region61: #{tpu_custom_call.1} parent=51 // loop_header
                %s344 = sphi 0, %s346
                %p345 = scmp.ge.s32.totalorder %s344, %s337
                %s349 = sphi 0, %s356
                %s350 = sphi %s340, %s359
                %s351 = sphi %s342, %s360
              $region62: #{tpu_custom_call.1} parent=51 // loop_header_branch
                %348 = sbr.rel (%p345) target = $region66
              $region63: #{tpu_custom_call.1} parent=51 // loop_body
                %v352 = vld [vmem:[%s350] sm:$0xff]
                %353 = vst [vmem:[%s351] sm:$0xff] %v352
                %s354 = sadd.s32 1, %s349
                %p355 = scmp.ge.s32.totalorder %s354, %s337
                %s356 = scalar_select %p355, 0, %s354
                %s357 = smul.u32 %s356, 8
                %s358 = smul.u32 %s356, 8
                %s359 = scalar_lea.vmem %s340, %s357 [#allocation5]
                %s360 = scalar_lea.vmem %s342, %s358
              $region64: #{tpu_custom_call.1} parent=51 // loop_footer
                %s346 = sadd.s32 %s344, 1
              $region65: #{tpu_custom_call.1} parent=51 // loop_footer_branch
                %343 = sbr.rel target = $region61
              $region66: #{tpu_custom_call.1} parent=51 // loop_exit
                _
            $region52: #{tpu_custom_call.1} parent=43 // pred_fallthru
              _
          $region44: #{tpu_custom_call.1} parent=39 // pred_fallthru
            _
          %411 = vnop
        $region40: #{tpu_custom_call.1} parent=31 // pred_fallthru
          _
      $region32: #{tpu_custom_call.1} parent=5 // pred_fallthru
        _
      %p412 = scmp.le.s32.totalorder 2, %s13
      // Predicated region
      $region89: #{tpu_custom_call.1} parent=5 // pred_check
        %p413 = pneg %p412
      $region90: #{tpu_custom_call.1} parent=5 // pred_check_branch
        %415 = sbr.rel (%p413) target = $region92
      $region91: #{tpu_custom_call.1} parent=5 // pred_region
        %s416 = ssub.s32 %s13, 2
        // Predicated region
        $region93: #{tpu_custom_call.1} parent=91 // pred_check
          %p417 = pneg %p110
        $region94: #{tpu_custom_call.1} parent=91 // pred_check_branch
          %419 = sbr.rel (%p417) target = $region96
        $region95: #{tpu_custom_call.1} parent=91 // pred_region
          %s420 = sand.u32 %s95, 1
          %s421 = sand.u32 %s95, 1
          %s422 = smul.addr %s421, 16
          %s423 = scalar_lea.vmem [#allocation5], %s422
        $region96: #{tpu_custom_call.1} parent=91 // pred_fallthru
          _
      $region92: #{tpu_custom_call.1} parent=5 // pred_fallthru
        _
    $region6: #{tpu_custom_call.1} parent=1 // loop_footer
      %s17 = sadd.s32 1, %s13
    $region7: #{tpu_custom_call.1} parent=1 // loop_footer_branch
      %12 = sbr.rel target = $region3
    $region8: #{tpu_custom_call.1} parent=1 // loop_exit
      _
    %424 = vsyncpa [#allocation4], 1
    %s425 = scalar_lea.sflag [#allocation4], 1
    %426 = vsyncpa %s425, 1

</llo_original>
